<compile_context>
chip_gen: v5e
topology: v5e:2x2
jax: 0.10.0
libtpu: 0.0.40
codegen_flags: <defaults>
</compile_context>

<pallas_src>
import functools

import jax
import jax.numpy as jnp
from jax import lax
from jax.experimental import pallas as pl
from jax.experimental.pallas import tpu as pltpu


def _round_up(x, m):
    return ((x + m - 1) // m) * m


def critic_kernel(s_ref, a_ref, w1s_ref, w1a_ref, b1_ref, w2_ref, b2_ref,
                  w3_ref, b3_ref, w4t_ref, b4_ref, o_ref):
    # Layer 1 with the concat folded in:
    #   cat([s, a]) @ W1 == s @ W1[:ds] + a @ W1[ds:]
    h = (jnp.dot(s_ref[...], w1s_ref[...], preferred_element_type=jnp.float32)
         + jnp.dot(a_ref[...], w1a_ref[...], preferred_element_type=jnp.float32)
         + b1_ref[...])
    h = jnp.maximum(h, 0.0)
    h = jnp.dot(h, w2_ref[...], preferred_element_type=jnp.float32) + b2_ref[...]
    h = jnp.maximum(h, 0.0)
    h = jnp.dot(h, w3_ref[...], preferred_element_type=jnp.float32) + b3_ref[...]
    h = jnp.maximum(h, 0.0)
    # fc4 as (1, fc3) @ (TB, fc3)^T -> (1, TB): lane-dense output row instead
    # of a (TB, 1) column (avoids masked partial stores on the output).
    out = lax.dot_general(w4t_ref[...], h,
                          dimension_numbers=(((1,), (1,)), ((), ())),
                          preferred_element_type=jnp.float32)
    # b4 is a scalar living in SMEM.
    o_ref[...] = out + b4_ref[0]


def init_critic_params(key, dim_state, dim_action_all, fc1, fc2, fc3):
    """Deterministic synthetic init (kaiming-normal-ish, fan_out/relu as in weights_init).

    Weights are stored (in_features, out_features), i.e. transposed vs PyTorch,
    so each layer is y = x @ W + b on the MXU.  Biases are (1, out).
    """
    din = dim_state + dim_action_all
    dims = [(din, fc1), (fc1, fc2), (fc2, fc3), (fc3, 1)]
    params = []
    keys = jax.random.split(key, len(dims))
    for k, (fan_in, fan_out) in zip(keys, dims):
        std = (2.0 / fan_out) ** 0.5  # kaiming_normal_, mode='fan_out', relu
        w = std * jax.random.normal(k, (fan_in, fan_out), dtype=jnp.float32)
        b = jnp.zeros((1, fan_out), dtype=jnp.float32)
        params.append((w, b))
    return params


@functools.partial(jax.jit, static_argnames=("block_rows",))
def critic_forward_batched(states, actions, params, *, block_rows=1024):
    """states: (B, dim_state)  actions: (B, dim_action_all)  ->  (B, 1) float32."""
    assert block_rows % 128 == 0  # lane-dense output tiles when grid > 1
    states = states.astype(jnp.float32)
    actions = actions.astype(jnp.float32)
    b_rows, ds = states.shape
    da = actions.shape[1]
    (w1, b1), (w2, b2), (w3, b3), (w4, b4) = params
    fc1 = w1.shape[1]
    fc2 = w2.shape[1]
    fc3 = w3.shape[1]

    # Split W1 so the concat happens "for free" inside the kernel.
    w1s = w1[:ds]
    w1a = w1[ds:]
    # fc4 weight as a (1, fc3) row for the NT matmul.
    w4t = w4.reshape(fc3, 1).T

    # Row tile: multiple of 8 sublanes; capped at block_rows (multiple of 128
    # whenever the grid has more than one tile).  Pad batch to whole tiles.
    tb = min(block_rows, _round_up(b_rows, 8))
    bp = _round_up(b_rows, tb)
    if bp != b_rows:
        states = jnp.pad(states, ((0, bp - b_rows), (0, 0)))
        actions = jnp.pad(actions, ((0, bp - b_rows), (0, 0)))

    out_row = pl.pallas_call(
        critic_kernel,
        out_shape=jax.ShapeDtypeStruct((1, bp), jnp.float32),
        grid=(bp // tb,),
        in_specs=[
            # Per-tile activations.
            pl.BlockSpec((tb, ds), lambda i: (i, 0)),
            pl.BlockSpec((tb, da), lambda i: (i, 0)),
            # Weights/biases: constant index_map -> resident across the grid.
            pl.BlockSpec((ds, fc1), lambda i: (0, 0)),
            pl.BlockSpec((da, fc1), lambda i: (0, 0)),
            pl.BlockSpec((1, fc1), lambda i: (0, 0)),
            pl.BlockSpec((fc1, fc2), lambda i: (0, 0)),
            pl.BlockSpec((1, fc2), lambda i: (0, 0)),
            pl.BlockSpec((fc2, fc3), lambda i: (0, 0)),
            pl.BlockSpec((1, fc3), lambda i: (0, 0)),
            pl.BlockSpec((1, fc3), lambda i: (0, 0)),
            # fc4 bias as a scalar in SMEM.
            pl.BlockSpec(memory_space=pltpu.MemorySpace.SMEM),
        ],
        # Lane-dense output: (1, BP) row, one (1, TB) slab per grid step.
        out_specs=pl.BlockSpec((1, tb), lambda i: (0, i)),
        compiler_params=pltpu.CompilerParams(
            dimension_semantics=("parallel",)),
    )(states, actions, w1s, w1a, b1, w2, b2, w3, b3, w4t, b4.reshape(1))
    return out_row.reshape(bp, 1)[:b_rows]


def critic_forward(state, action, params):
    """Exact PyTorch forward semantics: 1-D state/action -> (1,) float32."""
    out = critic_forward_batched(state[None, :], action[None, :], params)
    return out[0]


def critic_forward_ref(state, action, params):
    """Pure-JAX reference (handles both 1-D and batched inputs)."""
    z = jnp.concatenate([state, action], axis=-1).astype(jnp.float32)
    squeeze = z.ndim == 1
    if squeeze:
        z = z[None, :]
    (w1, b1), (w2, b2), (w3, b3), (w4, b4) = params
    h = jnp.maximum(z @ w1 + b1, 0.0)
    h = jnp.maximum(h @ w2 + b2, 0.0)
    h = jnp.maximum(h @ w3 + b3, 0.0)
    out = h @ w4 + b4
    return out[0] if squeeze else out


if __name__ == "__main__":
    dim_state, dim_action_all = 16, 8
    fc1, fc2, fc3 = 32, 32, 32

    key = jax.random.PRNGKey(0)
    k_params, k_state, k_action, k_bstate, k_baction = jax.random.split(key, 5)

    params = init_critic_params(k_params, dim_state, dim_action_all, fc1, fc2, fc3)

    # ---- Unbatched path (matches the PyTorch module's forward: 1-D -> (1,)) ----
    state = jax.random.normal(k_state, (dim_state,), dtype=jnp.float32)
    action = jax.random.normal(k_action, (dim_action_all,), dtype=jnp.float32)

    out = jax.block_until_ready(critic_forward(state, action, params))
    ref = critic_forward_ref(state, action, params)
    assert out.shape == (1,), out.shape
    assert jnp.allclose(out, ref, atol=1e-5, rtol=1e-5), (out, ref)

    # ---- Batched throughput path (single tile) ----
    B = 64
    states = jax.random.normal(k_bstate, (B, dim_state), dtype=jnp.float32)
    actions = jax.random.normal(k_baction, (B, dim_action_all), dtype=jnp.float32)

    out_b = jax.block_until_ready(critic_forward_batched(states, actions, params))
    ref_b = critic_forward_ref(states, actions, params)
    assert out_b.shape == (B, 1), out_b.shape
    assert jnp.allclose(out_b, ref_b, atol=1e-4, rtol=1e-4), (out_b, ref_b)

    # ---- Multi-tile path (exercises grid > 1 + padding + lane-dense out) ----
    B2 = 300
    states2 = jax.random.normal(k_bstate, (B2, dim_state), dtype=jnp.float32)
    actions2 = jax.random.normal(k_baction, (B2, dim_action_all), dtype=jnp.float32)
    out_b2 = jax.block_until_ready(
        critic_forward_batched(states2, actions2, params, block_rows=128))
    ref_b2 = critic_forward_ref(states2, actions2, params)
    assert out_b2.shape == (B2, 1), out_b2.shape
    assert jnp.allclose(out_b2, ref_b2, atol=1e-4, rtol=1e-4)

    print("KERNEL_OK")
</pallas_src>

<mosaic_0001>
module attributes {stable_mosaic.version = 11 : i64} {
  func.func @critic_kernel(%arg0: i32, %arg1: memref<8x16xf32, #tpu.memory_space<vmem>>, %arg2: memref<8x8xf32, #tpu.memory_space<vmem>>, %arg3: memref<16x32xf32, #tpu.memory_space<vmem>>, %arg4: memref<8x32xf32, #tpu.memory_space<vmem>>, %arg5: memref<1x32xf32, #tpu.memory_space<vmem>>, %arg6: memref<32x32xf32, #tpu.memory_space<vmem>>, %arg7: memref<1x32xf32, #tpu.memory_space<vmem>>, %arg8: memref<32x32xf32, #tpu.memory_space<vmem>>, %arg9: memref<1x32xf32, #tpu.memory_space<vmem>>, %arg10: memref<1x32xf32, #tpu.memory_space<vmem>>, %arg11: memref<1xf32, #tpu.memory_space<smem>>, %arg12: memref<1x8xf32, #tpu.memory_space<vmem>>) attributes {dimension_semantics = [#tpu.dimension_semantics<parallel>], iteration_bounds = array<i64: 1>, scalar_prefetch = 0 : i64, scratch_operands = 0 : i64, tpu.core_type = #tpu.core_type<tc>, window_params = [{transform_indices = @transform_0, window_bounds = array<i64: 8, 16>}, {transform_indices = @transform_1, window_bounds = array<i64: 8, 8>}, {pipeline_mode = #tpu.pipeline_mode<synchronous>, transform_indices = @transform_2, window_bounds = array<i64: 16, 32>}, {pipeline_mode = #tpu.pipeline_mode<synchronous>, transform_indices = @transform_3, window_bounds = array<i64: 8, 32>}, {pipeline_mode = #tpu.pipeline_mode<synchronous>, transform_indices = @transform_4, window_bounds = array<i64: 1, 32>}, {pipeline_mode = #tpu.pipeline_mode<synchronous>, transform_indices = @transform_5, window_bounds = array<i64: 32, 32>}, {pipeline_mode = #tpu.pipeline_mode<synchronous>, transform_indices = @transform_6, window_bounds = array<i64: 1, 32>}, {pipeline_mode = #tpu.pipeline_mode<synchronous>, transform_indices = @transform_7, window_bounds = array<i64: 32, 32>}, {pipeline_mode = #tpu.pipeline_mode<synchronous>, transform_indices = @transform_8, window_bounds = array<i64: 1, 32>}, {pipeline_mode = #tpu.pipeline_mode<synchronous>, transform_indices = @transform_9, window_bounds = array<i64: 1, 32>}, {transform_indices = @transform_10, window_bounds = array<i64: 1>}, {transform_indices = @transform_11, window_bounds = array<i64: 1, 8>}]} {
    %c0 = arith.constant 0 : index
    %c0_0 = arith.constant 0 : index
    %0 = vector.load %arg1[%c0, %c0_0] : memref<8x16xf32, #tpu.memory_space<vmem>>, vector<8x16xf32>
    %c0_1 = arith.constant 0 : index
    %c0_2 = arith.constant 0 : index
    %1 = vector.load %arg3[%c0_1, %c0_2] : memref<16x32xf32, #tpu.memory_space<vmem>>, vector<16x32xf32>
    %cst = arith.constant dense<0.000000e+00> : vector<8x32xf32>
    %2 = tpu.matmul %0, %1, %cst {dimension_numbers = #tpu.dot_dimension_numbers<[1], [0], [0], [1], [0, 0, 1, 1], [], []>} : vector<8x16xf32>, vector<16x32xf32>, vector<8x32xf32> -> vector<8x32xf32>
    %c0_3 = arith.constant 0 : index
    %c0_4 = arith.constant 0 : index
    %3 = vector.load %arg2[%c0_3, %c0_4] : memref<8x8xf32, #tpu.memory_space<vmem>>, vector<8x8xf32>
    %c0_5 = arith.constant 0 : index
    %c0_6 = arith.constant 0 : index
    %4 = vector.load %arg4[%c0_5, %c0_6] : memref<8x32xf32, #tpu.memory_space<vmem>>, vector<8x32xf32>
    %cst_7 = arith.constant dense<0.000000e+00> : vector<8x32xf32>
    %5 = tpu.matmul %3, %4, %cst_7 {dimension_numbers = #tpu.dot_dimension_numbers<[1], [0], [0], [1], [0, 0, 1, 1], [], []>} : vector<8x8xf32>, vector<8x32xf32>, vector<8x32xf32> -> vector<8x32xf32>
    %6 = arith.addf %2, %5 : vector<8x32xf32>
    %c0_8 = arith.constant 0 : index
    %c0_9 = arith.constant 0 : index
    %7 = vector.load %arg5[%c0_8, %c0_9] : memref<1x32xf32, #tpu.memory_space<vmem>>, vector<1x32xf32>
    %8 = vector.broadcast %7 : vector<1x32xf32> to vector<8x32xf32>
    %9 = arith.addf %6, %8 : vector<8x32xf32>
    %cst_10 = arith.constant 0.000000e+00 : f32
    %10 = vector.broadcast %cst_10 : f32 to vector<8x32xf32>
    %11 = arith.maximumf %9, %10 : vector<8x32xf32>
    %c0_11 = arith.constant 0 : index
    %c0_12 = arith.constant 0 : index
    %12 = vector.load %arg6[%c0_11, %c0_12] : memref<32x32xf32, #tpu.memory_space<vmem>>, vector<32x32xf32>
    %cst_13 = arith.constant dense<0.000000e+00> : vector<8x32xf32>
    %13 = tpu.matmul %11, %12, %cst_13 {dimension_numbers = #tpu.dot_dimension_numbers<[1], [0], [0], [1], [0, 0, 1, 1], [], []>} : vector<8x32xf32>, vector<32x32xf32>, vector<8x32xf32> -> vector<8x32xf32>
    %c0_14 = arith.constant 0 : index
    %c0_15 = arith.constant 0 : index
    %14 = vector.load %arg7[%c0_14, %c0_15] : memref<1x32xf32, #tpu.memory_space<vmem>>, vector<1x32xf32>
    %15 = vector.broadcast %14 : vector<1x32xf32> to vector<8x32xf32>
    %16 = arith.addf %13, %15 : vector<8x32xf32>
    %cst_16 = arith.constant 0.000000e+00 : f32
    %17 = vector.broadcast %cst_16 : f32 to vector<8x32xf32>
    %18 = arith.maximumf %16, %17 : vector<8x32xf32>
    %c0_17 = arith.constant 0 : index
    %c0_18 = arith.constant 0 : index
    %19 = vector.load %arg8[%c0_17, %c0_18] : memref<32x32xf32, #tpu.memory_space<vmem>>, vector<32x32xf32>
    %cst_19 = arith.constant dense<0.000000e+00> : vector<8x32xf32>
    %20 = tpu.matmul %18, %19, %cst_19 {dimension_numbers = #tpu.dot_dimension_numbers<[1], [0], [0], [1], [0, 0, 1, 1], [], []>} : vector<8x32xf32>, vector<32x32xf32>, vector<8x32xf32> -> vector<8x32xf32>
    %c0_20 = arith.constant 0 : index
    %c0_21 = arith.constant 0 : index
    %21 = vector.load %arg9[%c0_20, %c0_21] : memref<1x32xf32, #tpu.memory_space<vmem>>, vector<1x32xf32>
    %22 = vector.broadcast %21 : vector<1x32xf32> to vector<8x32xf32>
    %23 = arith.addf %20, %22 : vector<8x32xf32>
    %cst_22 = arith.constant 0.000000e+00 : f32
    %24 = vector.broadcast %cst_22 : f32 to vector<8x32xf32>
    %25 = arith.maximumf %23, %24 : vector<8x32xf32>
    %c0_23 = arith.constant 0 : index
    %c0_24 = arith.constant 0 : index
    %26 = vector.load %arg10[%c0_23, %c0_24] : memref<1x32xf32, #tpu.memory_space<vmem>>, vector<1x32xf32>
    %cst_25 = arith.constant dense<0.000000e+00> : vector<1x8xf32>
    %27 = tpu.matmul %26, %25, %cst_25 {dimension_numbers = #tpu.dot_dimension_numbers<[1], [1], [0], [0], [0, 0, 1, 0], [], []>} : vector<1x32xf32>, vector<8x32xf32>, vector<1x8xf32> -> vector<1x8xf32>
    %c0_26 = arith.constant 0 : index
    %28 = memref.load %arg11[%c0_26] : memref<1xf32, #tpu.memory_space<smem>>
    %29 = vector.broadcast %28 : f32 to vector<1x8xf32>
    %30 = arith.addf %27, %29 : vector<1x8xf32>
    %c0_27 = arith.constant 0 : index
    %c0_28 = arith.constant 0 : index
    %31 = vector.load %arg12[%c0_27, %c0_28] : memref<1x8xf32, #tpu.memory_space<vmem>>, vector<1x8xf32>
    tpu.vector_store %arg12[%c0_27, %c0_28], %30 {strides = array<i32>} : memref<1x8xf32, #tpu.memory_space<vmem>>, vector<1x8xf32>,
    return
  }
  func.func @transform_0(%arg0: i32) -> (i32, i32) {
    %c0_i32 = arith.constant 0 : i32
    %c0_i32_0 = arith.constant 0 : i32
    return %arg0, %c0_i32 : i32, i32
  }
  func.func @transform_1(%arg0: i32) -> (i32, i32) {
    %c0_i32 = arith.constant 0 : i32
    %c0_i32_0 = arith.constant 0 : i32
    return %arg0, %c0_i32 : i32, i32
  }
  func.func @transform_2(%arg0: i32) -> (i32, i32) {
    %c0_i32 = arith.constant 0 : i32
    %c0_i32_0 = arith.constant 0 : i32
    %c0_i32_1 = arith.constant 0 : i32
    return %c0_i32, %c0_i32_0 : i32, i32
  }
  func.func @transform_3(%arg0: i32) -> (i32, i32) {
    %c0_i32 = arith.constant 0 : i32
    %c0_i32_0 = arith.constant 0 : i32
    %c0_i32_1 = arith.constant 0 : i32
    return %c0_i32, %c0_i32_0 : i32, i32
  }
  func.func @transform_4(%arg0: i32) -> (i32, i32) {
    %c0_i32 = arith.constant 0 : i32
    %c0_i32_0 = arith.constant 0 : i32
    %c0_i32_1 = arith.constant 0 : i32
    return %c0_i32, %c0_i32_0 : i32, i32
  }
  func.func @transform_5(%arg0: i32) -> (i32, i32) {
    %c0_i32 = arith.constant 0 : i32
    %c0_i32_0 = arith.constant 0 : i32
    %c0_i32_1 = arith.constant 0 : i32
    return %c0_i32, %c0_i32_0 : i32, i32
  }
  func.func @transform_6(%arg0: i32) -> (i32, i32) {
    %c0_i32 = arith.constant 0 : i32
    %c0_i32_0 = arith.constant 0 : i32
    %c0_i32_1 = arith.constant 0 : i32
    return %c0_i32, %c0_i32_0 : i32, i32
  }
  func.func @transform_7(%arg0: i32) -> (i32, i32) {
    %c0_i32 = arith.constant 0 : i32
    %c0_i32_0 = arith.constant 0 : i32
    %c0_i32_1 = arith.constant 0 : i32
    return %c0_i32, %c0_i32_0 : i32, i32
  }
  func.func @transform_8(%arg0: i32) -> (i32, i32) {
    %c0_i32 = arith.constant 0 : i32
    %c0_i32_0 = arith.constant 0 : i32
    %c0_i32_1 = arith.constant 0 : i32
    return %c0_i32, %c0_i32_0 : i32, i32
  }
  func.func @transform_9(%arg0: i32) -> (i32, i32) {
    %c0_i32 = arith.constant 0 : i32
    %c0_i32_0 = arith.constant 0 : i32
    %c0_i32_1 = arith.constant 0 : i32
    return %c0_i32, %c0_i32_0 : i32, i32
  }
  func.func @transform_10(%arg0: i32) -> i32 {
    %c0_i32 = arith.constant 0 : i32
    %c0_i32_0 = arith.constant 0 : i32
    return %c0_i32 : i32
  }
  func.func @transform_11(%arg0: i32) -> (i32, i32) {
    %c0_i32 = arith.constant 0 : i32
    %c0_i32_0 = arith.constant 0 : i32
    return %c0_i32, %arg0 : i32, i32
  }
}

</mosaic_0001>

<llo_original>
// kernel: critic_forward_batched.1
$region0: #{critic_forward_batched.1}
  #allocation0 [shape = 'u32[]', space=smem, size = 0x4, offset = 0x4, fixed_abs, tag = 'smem constant byte address 0x4 - core index']
  #allocation1 [shape = 'u32[72,128]{1,0:T(1,128)}', space=vmem, size = 0x9000, scoped, tag = 'internal scratch']
  #allocation2 [shape = 'f32[1]{0:T(128)S(6)}', space=smem, size = 0x200, scoped, tag = 'scoped memory for critic_forward_batched.1']
  %s0 = inlined_call_operand.vmem [shape: f32[8,16], index: 0, kind: input, shape index: {}]
  %s1 = inlined_call_operand.vmem [shape: f32[8,8], index: 1, kind: input, shape index: {}]
  %s2 = inlined_call_operand.vmem [shape: f32[16,32], index: 2, kind: input, shape index: {}]
  %s3 = inlined_call_operand.vmem [shape: f32[8,32], index: 3, kind: input, shape index: {}]
  %s4 = inlined_call_operand.vmem [shape: f32[1,32], index: 4, kind: input, shape index: {}]
  %s5 = inlined_call_operand.vmem [shape: f32[32,32], index: 5, kind: input, shape index: {}]
  %s6 = inlined_call_operand.vmem [shape: f32[1,32], index: 6, kind: input, shape index: {}]
  %s7 = inlined_call_operand.hbm [shape: f32[32,32], index: 7, kind: input, shape index: {}]
  %s8 = inlined_call_operand.vmem [shape: f32[1,32], index: 8, kind: input, shape index: {}]
  %s9 = inlined_call_operand.vmem [shape: f32[1,32], index: 9, kind: input, shape index: {}]
  %s10 = inlined_call_operand.<no memory space> [shape: f32[1], index: 10, kind: input, shape index: {}]
  %s11 = inlined_call_operand.hbm [shape: f32[1,8], index: 11, kind: output, shape index: {}]
  %s12 = sld [smem:[#allocation0]]
  $region58: #{critic_forward_batched.1} parent=0
    _
  %s14 = ssub.s32 1, %s12
  %s15 = scalar_select 0, %s14, %s12
  %16 = sst [smem:[#allocation2]] %s10
  $region1: #{critic_forward_batched.1} parent=0
    #allocation3 [shape = 'u8[16384]{0}', space=vmem, size = 0x4000, scoped, tag = 'input window, operand 7, single buffered']
    #allocation4 [shape = 's32[1]{0}', space=sflag, size = 0x4, scoped, tag = 'scoped memory for critic_forward_batched.1']
    #allocation5 [shape = 's32[1]{0}', space=sflag, size = 0x4, scoped, tag = 'scoped memory for critic_forward_batched.1']
    #allocation6 [shape = 'u8[512]{0}', space=vmem, size = 0x400, scoped, tag = 'output window, operand 0, single buffered']
    %17 = vsyncpa [#allocation4], 0
    %18 = vsyncpa [#allocation5], 0
    // Predicated region
    $region2: #{critic_forward_batched.1} parent=1 // pred_check
      _
    $region3: #{critic_forward_batched.1} parent=1 // pred_check_branch
      %20 = sbr.rel (0) target = $region5
    $region4: #{critic_forward_batched.1} parent=1 // pred_region
      _
    $region5: #{critic_forward_batched.1} parent=1 // pred_fallthru
      _
    // Predicated region
    $region6: #{critic_forward_batched.1} parent=1 // pred_check
      _
    $region7: #{critic_forward_batched.1} parent=1 // pred_check_branch
      %22 = sbr.rel (0) target = $region9
    $region8: #{critic_forward_batched.1} parent=1 // pred_region
      _
    $region9: #{critic_forward_batched.1} parent=1 // pred_fallthru
      _
    // Predicated region
    $region10: #{critic_forward_batched.1} parent=1 // pred_check
      _
    $region11: #{critic_forward_batched.1} parent=1 // pred_check_branch
      %24 = sbr.rel (0) target = $region13
    $region12: #{critic_forward_batched.1} parent=1 // pred_region
      _
    $region13: #{critic_forward_batched.1} parent=1 // pred_fallthru
      _
    // Predicated region
    $region14: #{critic_forward_batched.1} parent=1 // pred_check
      _
    $region15: #{critic_forward_batched.1} parent=1 // pred_check_branch
      %26 = sbr.rel (0) target = $region17
    $region16: #{critic_forward_batched.1} parent=1 // pred_region
      _
    $region17: #{critic_forward_batched.1} parent=1 // pred_fallthru
      _
    // Predicated region
    $region18: #{critic_forward_batched.1} parent=1 // pred_check
      _
    $region19: #{critic_forward_batched.1} parent=1 // pred_check_branch
      %28 = sbr.rel (0) target = $region21
    $region20: #{critic_forward_batched.1} parent=1 // pred_region
      _
    $region21: #{critic_forward_batched.1} parent=1 // pred_fallthru
      _
    // Predicated region
    $region22: #{critic_forward_batched.1} parent=1 // pred_check
      _
    $region23: #{critic_forward_batched.1} parent=1 // pred_check_branch
      %30 = sbr.rel (0) target = $region25
    $region24: #{critic_forward_batched.1} parent=1 // pred_region
      _
    $region25: #{critic_forward_batched.1} parent=1 // pred_fallthru
      _
    // Predicated region
    $region26: #{critic_forward_batched.1} parent=1 // pred_check
      _
    $region27: #{critic_forward_batched.1} parent=1 // pred_check_branch
      %32 = sbr.rel (0) target = $region29
    $region28: #{critic_forward_batched.1} parent=1 // pred_region
      _
    $region29: #{critic_forward_batched.1} parent=1 // pred_fallthru
      _
    // Predicated region
    $region30: #{critic_forward_batched.1} parent=1 // pred_check
      _
    $region31: #{critic_forward_batched.1} parent=1 // pred_check_branch
      %34 = sbr.rel (0) target = $region33
    $region32: #{critic_forward_batched.1} parent=1 // pred_region
      %36 = vsyncadd [#allocation4], 0
      %s37 = sshll.u32 %s7, 4
      %s38 = int_to_ptr.hbm [resolvable:$true] %s37
      %s39 = sshll.u32 [#allocation3], 4
      %s40 = int_to_ptr.vmem [resolvable:$true] %s39
      %45 = dma.hbm_to_vmem [thread:$0]  %s38, 512, %s40, [#allocation4], 128, 128, 8
    $region33: #{critic_forward_batched.1} parent=1 // pred_fallthru
      _
    // Predicated region
    $region34: #{critic_forward_batched.1} parent=1 // pred_check
      _
    $region35: #{critic_forward_batched.1} parent=1 // pred_check_branch
      %47 = sbr.rel (0) target = $region37
    $region36: #{critic_forward_batched.1} parent=1 // pred_region
      _
    $region37: #{critic_forward_batched.1} parent=1 // pred_fallthru
      _
    // Predicated region
    $region38: #{critic_forward_batched.1} parent=1 // pred_check
      _
    $region39: #{critic_forward_batched.1} parent=1 // pred_check_branch
      %49 = sbr.rel (0) target = $region41
    $region40: #{critic_forward_batched.1} parent=1 // pred_region
      _
    $region41: #{critic_forward_batched.1} parent=1 // pred_fallthru
      _
    // Predicated region
    $region42: #{critic_forward_batched.1} parent=1 // pred_check
      _
    $region43: #{critic_forward_batched.1} parent=1 // pred_check_branch
      %51 = sbr.rel (0) target = $region45
    $region44: #{critic_forward_batched.1} parent=1 // pred_region
      _
    $region45: #{critic_forward_batched.1} parent=1 // pred_fallthru
      _
    // Predicated region
    $region46: #{critic_forward_batched.1} parent=1 // pred_check
      _
    $region47: #{critic_forward_batched.1} parent=1 // pred_check_branch
      %53 = sbr.rel (0) target = $region49
    $region48: #{critic_forward_batched.1} parent=1 // pred_region
      %55 = dma.done [#allocation4], 512
    $region49: #{critic_forward_batched.1} parent=1 // pred_fallthru
      _
    %v56 = vld [vmem:[%s0] sm:$0xff]
    %v57 = vld [vmem:[%s2] sm:$0xff]
    %v58 = vld [vmem:[%s2 + $0x8] sm:$0xff]
    %v59 = vld [vmem:[%s1] sm:$0xff]
    %v60 = vld [vmem:[%s3] sm:$0xff]
    %vm61 = vcmask 64512
    %v63 = vsel %vm61, %v59, 0
    %65 = vmatpush.msra.mxu0 0.0
    %66 = vmatpush.msra.mxu0 0.0
    %67 = vmatpush.msra.mxu0 0.0
    %68 = vmatpush.msra.mxu0 0.0
    %69 = vmatpush.msra.mxu0 0.0
    %70 = vmatpush.msra.mxu0 0.0
    %71 = vmatpush.msra.mxu0 0.0
    %72 = vmatpush.msra.mxu0 0.0
    %73 = vmatpush.msra.mxu0 0.0
    %74 = vmatpush.msra.mxu0 0.0
    %75 = vmatpush.msra.mxu0 0.0
    %76 = vmatpush.msra.mxu0 0.0
    %77 = vmatpush.msra.mxu0 0.0
    %78 = vmatpush.msra.mxu0 0.0
    %79 = vmatpush.msra.mxu0 0.0
    %80 = vmatpush.msra.mxu0 %v60
    %81 = vmatmul.f32.gmra.mxu0 %v63
    %v82 = vpop.f32.mrf.mxu0
    %v83 = vadd.f32 0.0, %v82
    %84 = vdwg.mxu0
    %vm85 = vcmask 130048
    %v87 = vsel %vm85, %v56, 0
    %89 = vmatpush.msra.mxu0 0.0
    %90 = vmatpush.msra.mxu0 0.0
    %91 = vmatpush.msra.mxu0 0.0
    %92 = vmatpush.msra.mxu0 0.0
    %93 = vmatpush.msra.mxu0 0.0
    %94 = vmatpush.msra.mxu0 0.0
    %95 = vmatpush.msra.mxu0 0.0
    %96 = vmatpush.msra.mxu0 0.0
    %97 = vmatpush.msra.mxu0 0.0
    %98 = vmatpush.msra.mxu0 0.0
    %99 = vmatpush.msra.mxu0 0.0
    %100 = vmatpush.msra.mxu0 0.0
    %101 = vmatpush.msra.mxu0 0.0
    %102 = vmatpush.msra.mxu0 0.0
    %103 = vmatpush.msra.mxu0 %v58
    %104 = vmatpush.msra.mxu0 %v57
    %105 = vmatmul.f32.gmra.mxu0 %v87
    %v106 = vpop.f32.mrf.mxu0
    %v107 = vadd.f32 %v83, %v106
    %108 = vdwg.mxu0
    %v109 = vld [vmem:[%s4] sm:$0x1]
    %v111 = vperm.slane %v109, 0
    %v113 = vadd.f32 %v107, %v111
    %v114 = vmax.f32 %v113, 0.0
    %v115 = vld [vmem:[%s5] sm:$0xff]
    %v116 = vld [vmem:[%s5 + $0x8] sm:$0xff]
    %v117 = vld [vmem:[%s5 + $0x10] sm:$0xff]
    %v118 = vld [vmem:[%s5 + $0x18] sm:$0xff]
    %v119 = vld [vmem:[%s6] sm:$0x1]
    %v121 = vperm.slane %v119, 0
    %vm123 = vcmask 261120
    %v125 = vsel %vm123, %v114, 0
    %127 = vmatpush.msra.mxu0 0.0
    %128 = vmatpush.msra.mxu0 0.0
    %129 = vmatpush.msra.mxu0 0.0
    %130 = vmatpush.msra.mxu0 0.0
    %131 = vmatpush.msra.mxu0 0.0
    %132 = vmatpush.msra.mxu0 0.0
    %133 = vmatpush.msra.mxu0 0.0
    %134 = vmatpush.msra.mxu0 0.0
    %135 = vmatpush.msra.mxu0 0.0
    %136 = vmatpush.msra.mxu0 0.0
    %137 = vmatpush.msra.mxu0 0.0
    %138 = vmatpush.msra.mxu0 0.0
    %139 = vmatpush.msra.mxu0 %v118
    %140 = vmatpush.msra.mxu0 %v117
    %141 = vmatpush.msra.mxu0 %v116
    %142 = vmatpush.msra.mxu0 %v115
    %143 = vmatmul.f32.gmra.mxu0 %v125
    %v144 = vpop.f32.mrf.mxu0
    %v145 = vadd.f32 %v121, %v144
    %146 = vdwg.mxu0
    %v147 = vmax.f32 %v145, 0.0
    %v148 = vld [vmem:[#allocation3] sm:$0xff]
    %v149 = vld [vmem:[#allocation3 + $0x8] sm:$0xff]
    %v150 = vld [vmem:[#allocation3 + $0x10] sm:$0xff]
    %v151 = vld [vmem:[#allocation3 + $0x18] sm:$0xff]
    %v152 = vld [vmem:[%s8] sm:$0x1]
    %v154 = vperm.slane %v152, 0
    %v157 = vsel %vm123, %v147, 0
    %159 = vmatpush.msra.mxu0 0.0
    %160 = vmatpush.msra.mxu0 0.0
    %161 = vmatpush.msra.mxu0 0.0
    %162 = vmatpush.msra.mxu0 0.0
    %163 = vmatpush.msra.mxu0 0.0
    %164 = vmatpush.msra.mxu0 0.0
    %165 = vmatpush.msra.mxu0 0.0
    %166 = vmatpush.msra.mxu0 0.0
    %167 = vmatpush.msra.mxu0 0.0
    %168 = vmatpush.msra.mxu0 0.0
    %169 = vmatpush.msra.mxu0 0.0
    %170 = vmatpush.msra.mxu0 0.0
    %171 = vmatpush.msra.mxu0 %v151
    %172 = vmatpush.msra.mxu0 %v150
    %173 = vmatpush.msra.mxu0 %v149
    %174 = vmatpush.msra.mxu0 %v148
    %175 = vmatmul.f32.gmra.mxu0 %v157
    %v176 = vpop.f32.mrf.mxu0
    %v177 = vadd.f32 %v154, %v176
    %178 = vdwg.mxu0
    %v179 = vmax.f32 %v177, 0.0
    %v180 = vld [vmem:[%s9] sm:$0x1]
    %s181 = sld [smem:[#allocation2]]
    %v182 = vstv %s181
    %v184 = vsel %vm123, %v180, 0
    %v187 = vsel %vm123, %v179, 0
    %189 = vmatpush.xpose.msra.mxu0 0.0
    %190 = vmatpush.xpose.msra.mxu0 0.0
    %191 = vmatpush.xpose.msra.mxu0 0.0
    %192 = vmatpush.xpose.msra.mxu0 0.0
    %193 = vmatpush.xpose.msra.mxu0 0.0
    %194 = vmatpush.xpose.msra.mxu0 0.0
    %195 = vmatpush.xpose.msra.mxu0 0.0
    %196 = vmatpush.xpose.msra.mxu0 0.0
    %197 = vmatpush.xpose.msra.mxu0 0.0
    %198 = vmatpush.xpose.msra.mxu0 0.0
    %199 = vmatpush.xpose.msra.mxu0 0.0
    %200 = vmatpush.xpose.msra.mxu0 0.0
    %201 = vmatpush.xpose.msra.mxu0 0.0
    %202 = vmatpush.xpose.msra.mxu0 0.0
    %203 = vmatpush.xpose.msra.mxu0 0.0
    %204 = vmatpush.xpose.msra.mxu0 %v187
    %205 = vmatmul.f32.gmra.mxu0 %v184
    %v206 = vpop.f32.mrf.mxu0
    %v207 = vadd.f32 %v182, %v206
    %208 = vdwg.mxu0
    %vm209 = vcmask 57344
    %210 = vst.msk [vmem:[#allocation6] sm:$0x1] %vm209, %v207
    // Predicated region
    $region50: #{critic_forward_batched.1} parent=1 // pred_check
      _
    $region51: #{critic_forward_batched.1} parent=1 // pred_check_branch
      %212 = sbr.rel (0) target = $region53
    $region52: #{critic_forward_batched.1} parent=1 // pred_region
      %214 = vsyncadd [#allocation5], 0
      %s216 = sshll.u32 [#allocation6], 4
      %s217 = int_to_ptr.vmem [resolvable:$true] %s216
      %s218 = sshll.u32 %s11, 4
      %s219 = int_to_ptr.hbm [resolvable:$true] %s218
      %221 = dma.vmem_to_hbm [thread:$0]  %s217, 16, %s219, [#allocation5]
    $region53: #{critic_forward_batched.1} parent=1 // pred_fallthru
      _
    // Predicated region
    $region54: #{critic_forward_batched.1} parent=1 // pred_check
      _
    $region55: #{critic_forward_batched.1} parent=1 // pred_check_branch
      %223 = sbr.rel (0) target = $region57
    $region56: #{critic_forward_batched.1} parent=1 // pred_region
      %225 = dma.done [#allocation5], 16
    $region57: #{critic_forward_batched.1} parent=1 // pred_fallthru
      _
    %226 = vsyncpa [#allocation4], 1
    %227 = vsyncpa [#allocation5], 1

</llo_original>
